<compile_context>
chip_gen: v7x
topology: tpu7x:2x2x1
jax: 0.10.0
libtpu: 0.0.40
codegen_flags: <defaults>
</compile_context>

<pallas_src>
import functools

import jax
import jax.numpy as jnp
import numpy as np
from jax.experimental import pallas as pl
from jax.experimental.pallas import tpu as pltpu


def _round_up(x: int, m: int) -> int:
    return ((x + m - 1) // m) * m


def _corn_kernel(preds_ref, target_ref, loss_out_ref, cnt_out_ref,
                 loss_acc, cnt_acc, *,
                 num_classes: int, block_cols: int, num_examples: int,
                 tiles_per_core: int):
    c = pl.program_id(0)          # partial-sum slot / TensorCore (parallel axis)
    i = pl.program_id(1)          # tile within this core's range (reduction axis)

    @pl.when(i == 0)
    def _init():
        loss_acc[...] = jnp.zeros_like(loss_acc)
        cnt_acc[...] = jnp.zeros_like(cnt_acc)

    p = preds_ref[...].astype(jnp.float32)       # (C, bc): lanes = examples, sublanes = classes
    y = target_ref[...].astype(jnp.int32)        # (1, bc)

    # Global example index of each lane (logical; independent of DMA clamping).
    tile = c * tiles_per_core + i
    col = jax.lax.broadcasted_iota(jnp.int32, y.shape, 1) + tile * block_cols
    # Sanitize the ragged tail (and fully out-of-range duplicate tiles): target = -1
    # falls outside every CORN conditional subset, so those lanes contribute nothing.
    y = jnp.where(col < num_examples, y, -1)

    # Task index j along sublanes; only j < num_classes-1 are real tasks.
    task = jax.lax.broadcasted_iota(jnp.int32, p.shape, 0)
    mask = (y > task - 1) & (task < num_classes - 1)
    label = (y > task).astype(jnp.float32)

    # -[label*logsig(p) + (1-label)*(logsig(p)-p)] == softplus(p) - label*p
    # Stable softplus; plain log/exp for maximally safe Mosaic lowering.
    softplus = jnp.maximum(p, 0.0) + jnp.log(1.0 + jnp.exp(-jnp.abs(p)))
    per_elem = softplus - label * p

    # Element-wise (VPU-only) accumulation; jnp.where so garbage tail logits can't NaN.
    loss_acc[...] += jnp.where(mask, per_elem, 0.0)
    # Valid (example, task) pairs per lane: clip(y+1, 0, C-1)  (y = -1 -> 0).
    cnt_acc[...] += jnp.clip(y + 1, 0, num_classes - 1).astype(jnp.float32)

    @pl.when(i == pl.num_programs(1) - 1)
    def _finalize():
        loss_out_ref[...] = jnp.full(loss_out_ref.shape, jnp.sum(loss_acc[...]),
                                     loss_out_ref.dtype)
        cnt_out_ref[...] = jnp.full(cnt_out_ref.shape, jnp.sum(cnt_acc[...]),
                                    cnt_out_ref.dtype)


def corn_loss(preds: jax.Array, target: jax.Array, *, block_cols=None) -> jax.Array:
    """CORN loss. preds: (N, num_classes) logits, target: (N,) integer class labels."""
    assert preds.ndim == 2, preds.shape
    n, num_classes = preds.shape
    assert num_classes >= 2, "CORN loss needs at least 2 classes"
    target = jnp.asarray(target).reshape(-1)
    assert target.shape[0] == n, (target.shape, n)

    # Lane-dense layout: examples along lanes, classes along sublanes.
    preds_t = preds.T                                     # (C, N) — one XLA transpose
    target_row = target.astype(jnp.int32).reshape(1, n)   # free reshape

    # Tile width (examples per grid step): multiple of 128, or the full width.
    # Budget: 2x double-buffered preds + 2x target (both sublane-padded to 8) plus the
    # two resident f32 accumulators stay ~<= 8 MiB (v5e default scoped VMEM is 16 MiB).
    cpad = _round_up(num_classes, 8)
    bytes_per_col = 4 * (2 * cpad + 2 * 8 + cpad + 8)
    cap = max(128, ((8 * 1024 * 1024) // bytes_per_col) // 128 * 128)
    if block_cols is None:
        block_cols = n if n <= cap else cap
    else:
        block_cols = max(128, _round_up(int(block_cols), 128))
        if block_cols >= n:
            block_cols = n            # full-width single tile (always a legal block)

    total_tiles = pl.cdiv(n, block_cols)
    num_cores = 2 if total_tiles >= 2 else 1   # v7x: 2 TCs; harmless serial split on 1-TC chips
    tiles_per_core = pl.cdiv(total_tiles, num_cores)
    last_tile = total_tiles - 1

    def in_idx(c, i):
        # Clamp the DMA block index; logically out-of-range tiles contribute 0 in-kernel.
        return (0, jnp.minimum(c * tiles_per_core + i, last_tile))

    kernel = functools.partial(
        _corn_kernel, num_classes=num_classes, block_cols=block_cols,
        num_examples=n, tiles_per_core=tiles_per_core)

    loss_parts, cnt_parts = pl.pallas_call(
        kernel,
        out_shape=(jax.ShapeDtypeStruct((num_cores * 8, 128), jnp.float32),
                   jax.ShapeDtypeStruct((num_cores * 8, 128), jnp.float32)),
        grid=(num_cores, tiles_per_core),
        in_specs=[
            pl.BlockSpec((num_classes, block_cols), in_idx),
            pl.BlockSpec((1, block_cols), in_idx),
        ],
        out_specs=(
            pl.BlockSpec((8, 128), lambda c, i: (c, 0)),
            pl.BlockSpec((8, 128), lambda c, i: (c, 0)),
        ),
        scratch_shapes=[
            pltpu.VMEM((num_classes, block_cols), jnp.float32),  # per-lane loss partials
            pltpu.VMEM((1, block_cols), jnp.float32),            # per-lane valid-pair counts
        ],
        compiler_params=pltpu.CompilerParams(
            dimension_semantics=("parallel", "arbitrary")),
    )(preds_t, target_row)

    loss_sum = jnp.sum(loss_parts[::8, 0])
    num_pairs = jnp.sum(cnt_parts[::8, 0])
    return loss_sum / num_pairs


class CORNLoss:
    """Mirror of the PyTorch CORNLoss module: forward(preds, target) -> scalar."""
    # TODO(synk): register_loss / Registry / LogitsInputsMixin are Python-side config
    # plumbing with no kernel equivalent; only forward() is implemented.

    def __init__(self, config=None):
        del config

    def __call__(self, preds: jax.Array, target: jax.Array) -> jax.Array:
        return self.forward(preds, target)

    def forward(self, preds: jax.Array, target: jax.Array) -> jax.Array:
        # num_classes is taken from preds.shape[1], exactly like the torch module.
        return corn_loss(preds, target)


# ----------------------------- reference (numpy) -----------------------------

def _log_sigmoid_np(x):
    z = np.log1p(np.exp(-np.abs(x)))
    return np.where(x >= 0.0, -z, x - z)


def _corn_loss_reference(preds: np.ndarray, target: np.ndarray) -> float:
    """Direct numpy transcription of coral_pytorch.losses.corn_loss."""
    preds = np.asarray(preds, dtype=np.float64)
    target = np.asarray(target)
    num_classes = preds.shape[1]
    losses = 0.0
    num_examples = 0
    for j in range(num_classes - 1):
        sel = target > (j - 1)
        labels = (target[sel] > j).astype(np.float64)
        if labels.size < 1:
            continue
        num_examples += labels.size
        pred = preds[sel, j]
        logsig = _log_sigmoid_np(pred)
        losses += -np.sum(logsig * labels + (logsig - pred) * (1.0 - labels))
    return losses / num_examples


if __name__ == "__main__":
    key = jax.random.PRNGKey(0)
    k_logits, k_labels = jax.random.split(key)

    batch, num_classes = 200, 5
    preds = jax.random.normal(k_logits, (batch, num_classes), dtype=jnp.float32)
    target = jax.random.randint(k_labels, (batch,), 0, num_classes, dtype=jnp.int32)

    ref = _corn_loss_reference(np.asarray(preds), np.asarray(target))

    # Default config: single full-width lane-dense tile.
    loss = corn_loss(preds, target)
    jax.block_until_ready(loss)
    assert np.allclose(float(loss), ref, rtol=1e-4, atol=1e-6), (float(loss), ref)

    # Forced small tile: multi-tile grid with a ragged masked tail plus the
    # two-partial ("2 TC") split, exercising init / accumulate / finalize paths.
    loss2 = corn_loss(preds, target, block_cols=128)
    jax.block_until_ready(loss2)
    assert np.allclose(float(loss2), ref, rtol=1e-4, atol=1e-6), (float(loss2), ref)

    # Module-style wrapper.
    loss3 = CORNLoss()(preds, target)
    jax.block_until_ready(loss3)
    assert np.allclose(float(loss3), ref, rtol=1e-4, atol=1e-6), (float(loss3), ref)

    print("KERNEL_OK")
</pallas_src>

<mosaic_0001>
module attributes {stable_mosaic.version = 11 : i64} {
  func.func @_corn_kernel(%arg0: i32, %arg1: i32, %arg2: memref<5x200xf32, #tpu.memory_space<vmem>>, %arg3: memref<1x200xi32, #tpu.memory_space<vmem>>, %arg4: memref<8x128xf32, #tpu.memory_space<vmem>>, %arg5: memref<8x128xf32, #tpu.memory_space<vmem>>, %arg6: memref<5x200xf32, #tpu.memory_space<vmem>>, %arg7: memref<1x200xf32, #tpu.memory_space<vmem>>) attributes {dimension_semantics = [#tpu.dimension_semantics<parallel>, #tpu.dimension_semantics<arbitrary>], iteration_bounds = array<i64: 1, 1>, scalar_prefetch = 0 : i64, scratch_operands = 2 : i64, tpu.core_type = #tpu.core_type<tc>, window_params = [{transform_indices = @transform_0, window_bounds = array<i64: 5, 200>}, {transform_indices = @transform_1, window_bounds = array<i64: 1, 200>}, {transform_indices = @transform_2, window_bounds = array<i64: 8, 128>}, {transform_indices = @transform_3, window_bounds = array<i64: 8, 128>}]} {
    %c0_i32 = arith.constant 0 : i32
    %0 = arith.cmpi eq, %arg1, %c0_i32 : i32
    %1 = arith.extui %0 : i1 to i32
    %c0_i32_0 = arith.constant 0 : i32
    %2 = arith.cmpi ne, %1, %c0_i32_0 : i32
    scf.if %2 {
      %cst_22 = arith.constant 0.000000e+00 : f32
      %57 = vector.broadcast %cst_22 : f32 to vector<5x200xf32>
      %c0_23 = arith.constant 0 : index
      %c0_24 = arith.constant 0 : index
      %58 = vector.load %arg6[%c0_23, %c0_24] : memref<5x200xf32, #tpu.memory_space<vmem>>, vector<5x200xf32>
      tpu.vector_store %arg6[%c0_23, %c0_24], %57 {strides = array<i32>} : memref<5x200xf32, #tpu.memory_space<vmem>>, vector<5x200xf32>,
      %cst_25 = arith.constant 0.000000e+00 : f32
      %59 = vector.broadcast %cst_25 : f32 to vector<1x200xf32>
      %c0_26 = arith.constant 0 : index
      %c0_27 = arith.constant 0 : index
      %60 = vector.load %arg7[%c0_26, %c0_27] : memref<1x200xf32, #tpu.memory_space<vmem>>, vector<1x200xf32>
      tpu.vector_store %arg7[%c0_26, %c0_27], %59 {strides = array<i32>} : memref<1x200xf32, #tpu.memory_space<vmem>>, vector<1x200xf32>,
    } else {
    }
    %c0 = arith.constant 0 : index
    %c0_1 = arith.constant 0 : index
    %3 = vector.load %arg2[%c0, %c0_1] : memref<5x200xf32, #tpu.memory_space<vmem>>, vector<5x200xf32>
    %c0_2 = arith.constant 0 : index
    %c0_3 = arith.constant 0 : index
    %4 = vector.load %arg3[%c0_2, %c0_3] : memref<1x200xi32, #tpu.memory_space<vmem>>, vector<1x200xi32>
    %c1_i32 = arith.constant 1 : i32
    %5 = arith.muli %arg0, %c1_i32 : i32
    %6 = arith.addi %5, %arg1 : i32
    %7 = tpu.iota {dimensions = array<i32: 1>} : vector<1x200xi32>
    %c200_i32 = arith.constant 200 : i32
    %8 = arith.muli %6, %c200_i32 : i32
    %9 = vector.broadcast %8 : i32 to vector<1x200xi32>
    %10 = arith.addi %7, %9 : vector<1x200xi32>
    %c200_i32_4 = arith.constant 200 : i32
    %11 = vector.broadcast %c200_i32_4 : i32 to vector<1x200xi32>
    %12 = arith.cmpi slt, %10, %11 : vector<1x200xi32>
    %c-1_i32 = arith.constant -1 : i32
    %13 = vector.broadcast %c-1_i32 : i32 to vector<1x200xi32>
    %14 = arith.select %12, %4, %13 : vector<1x200xi1>, vector<1x200xi32>
    %15 = tpu.iota {dimensions = array<i32: 0>} : vector<5x200xi32>
    %c1_i32_5 = arith.constant 1 : i32
    %16 = vector.broadcast %c1_i32_5 : i32 to vector<5x200xi32>
    %17 = arith.subi %15, %16 : vector<5x200xi32>
    %18 = vector.broadcast %14 : vector<1x200xi32> to vector<5x200xi32>
    %19 = arith.cmpi sgt, %18, %17 : vector<5x200xi32>
    %c4_i32 = arith.constant 4 : i32
    %20 = vector.broadcast %c4_i32 : i32 to vector<5x200xi32>
    %21 = arith.cmpi slt, %15, %20 : vector<5x200xi32>
    %22 = arith.andi %19, %21 : vector<5x200xi1>
    %23 = vector.broadcast %14 : vector<1x200xi32> to vector<5x200xi32>
    %24 = arith.cmpi sgt, %23, %15 : vector<5x200xi32>
    %25 = arith.extui %24 : vector<5x200xi1> to vector<5x200xi32>
    %26 = arith.sitofp %25 : vector<5x200xi32> to vector<5x200xf32>
    %cst = arith.constant 0.000000e+00 : f32
    %27 = vector.broadcast %cst : f32 to vector<5x200xf32>
    %28 = arith.maximumf %3, %27 : vector<5x200xf32>
    %29 = math.absf %3 : vector<5x200xf32>
    %cst_6 = arith.constant 0.000000e+00 : f32
    %30 = vector.broadcast %cst_6 : f32 to vector<5x200xf32>
    %31 = arith.subf %30, %29 : vector<5x200xf32>
    %32 = math.exp %31 : vector<5x200xf32>
    %cst_7 = arith.constant 1.000000e+00 : f32
    %33 = vector.broadcast %cst_7 : f32 to vector<5x200xf32>
    %34 = arith.addf %33, %32 : vector<5x200xf32>
    %35 = math.log %34 : vector<5x200xf32>
    %36 = arith.addf %28, %35 : vector<5x200xf32>
    %37 = arith.mulf %26, %3 : vector<5x200xf32>
    %38 = arith.subf %36, %37 : vector<5x200xf32>
    %c0_8 = arith.constant 0 : index
    %c0_9 = arith.constant 0 : index
    %39 = vector.load %arg6[%c0_8, %c0_9] : memref<5x200xf32, #tpu.memory_space<vmem>>, vector<5x200xf32>
    %cst_10 = arith.constant 0.000000e+00 : f32
    %40 = vector.broadcast %cst_10 : f32 to vector<5x200xf32>
    %41 = arith.select %22, %38, %40 : vector<5x200xi1>, vector<5x200xf32>
    %42 = arith.addf %39, %41 : vector<5x200xf32>
    %c0_11 = arith.constant 0 : index
    %c0_12 = arith.constant 0 : index
    %43 = vector.load %arg6[%c0_11, %c0_12] : memref<5x200xf32, #tpu.memory_space<vmem>>, vector<5x200xf32>
    tpu.vector_store %arg6[%c0_11, %c0_12], %42 {strides = array<i32>} : memref<5x200xf32, #tpu.memory_space<vmem>>, vector<5x200xf32>,
    %c0_13 = arith.constant 0 : index
    %c0_14 = arith.constant 0 : index
    %44 = vector.load %arg7[%c0_13, %c0_14] : memref<1x200xf32, #tpu.memory_space<vmem>>, vector<1x200xf32>
    %c1_i32_15 = arith.constant 1 : i32
    %45 = vector.broadcast %c1_i32_15 : i32 to vector<1x200xi32>
    %46 = arith.addi %14, %45 : vector<1x200xi32>
    %c0_i32_16 = arith.constant 0 : i32
    %c4_i32_17 = arith.constant 4 : i32
    %47 = vector.broadcast %c0_i32_16 : i32 to vector<1x200xi32>
    %48 = arith.maxsi %47, %46 : vector<1x200xi32>
    %49 = vector.broadcast %c4_i32_17 : i32 to vector<1x200xi32>
    %50 = arith.minsi %49, %48 : vector<1x200xi32>
    %51 = arith.sitofp %50 : vector<1x200xi32> to vector<1x200xf32>
    %52 = arith.addf %44, %51 : vector<1x200xf32>
    %c0_18 = arith.constant 0 : index
    %c0_19 = arith.constant 0 : index
    %53 = vector.load %arg7[%c0_18, %c0_19] : memref<1x200xf32, #tpu.memory_space<vmem>>, vector<1x200xf32>
    tpu.vector_store %arg7[%c0_18, %c0_19], %52 {strides = array<i32>} : memref<1x200xf32, #tpu.memory_space<vmem>>, vector<1x200xf32>,
    %c0_i32_20 = arith.constant 0 : i32
    %54 = arith.cmpi eq, %arg1, %c0_i32_20 : i32
    %55 = arith.extui %54 : i1 to i32
    %c0_i32_21 = arith.constant 0 : i32
    %56 = arith.cmpi ne, %55, %c0_i32_21 : i32
    scf.if %56 {
      %c0_22 = arith.constant 0 : index
      %c0_23 = arith.constant 0 : index
      %57 = vector.load %arg6[%c0_22, %c0_23] : memref<5x200xf32, #tpu.memory_space<vmem>>, vector<5x200xf32>
      %58 = vector.shape_cast %57 : vector<5x200xf32> to vector<1x5x200xf32>
      %cst_24 = arith.constant dense<0.000000e+00> : vector<1xf32>
      %59 = vector.multi_reduction <add>, %58, %cst_24 [1, 2] : vector<1x5x200xf32> to vector<1xf32>
      %60 = vector.shape_cast %59 : vector<1xf32> to vector<1x1x1xf32>
      %61 = vector.extract %60[0, 0, 0] : f32 from vector<1x1x1xf32>
      %62 = vector.broadcast %61 : f32 to vector<8x128xf32>
      %c0_25 = arith.constant 0 : index
      %c0_26 = arith.constant 0 : index
      %63 = vector.load %arg4[%c0_25, %c0_26] : memref<8x128xf32, #tpu.memory_space<vmem>>, vector<8x128xf32>
      tpu.vector_store %arg4[%c0_25, %c0_26], %62 {strides = array<i32>} : memref<8x128xf32, #tpu.memory_space<vmem>>, vector<8x128xf32>,
      %c0_27 = arith.constant 0 : index
      %c0_28 = arith.constant 0 : index
      %64 = vector.load %arg7[%c0_27, %c0_28] : memref<1x200xf32, #tpu.memory_space<vmem>>, vector<1x200xf32>
      %65 = vector.shape_cast %64 : vector<1x200xf32> to vector<1x1x200xf32>
      %cst_29 = arith.constant dense<0.000000e+00> : vector<1xf32>
      %66 = vector.multi_reduction <add>, %65, %cst_29 [1, 2] : vector<1x1x200xf32> to vector<1xf32>
      %67 = vector.shape_cast %66 : vector<1xf32> to vector<1x1x1xf32>
      %68 = vector.extract %67[0, 0, 0] : f32 from vector<1x1x1xf32>
      %69 = vector.broadcast %68 : f32 to vector<8x128xf32>
      %c0_30 = arith.constant 0 : index
      %c0_31 = arith.constant 0 : index
      %70 = vector.load %arg5[%c0_30, %c0_31] : memref<8x128xf32, #tpu.memory_space<vmem>>, vector<8x128xf32>
      tpu.vector_store %arg5[%c0_30, %c0_31], %69 {strides = array<i32>} : memref<8x128xf32, #tpu.memory_space<vmem>>, vector<8x128xf32>,
    } else {
    }
    return
  }
  func.func @transform_0(%arg0: i32, %arg1: i32) -> (i32, i32) {
    %c1_i32 = arith.constant 1 : i32
    %0 = arith.muli %arg0, %c1_i32 : i32
    %1 = arith.addi %0, %arg1 : i32
    %c0_i32 = arith.constant 0 : i32
    %2 = arith.minsi %1, %c0_i32 : i32
    %c0_i32_0 = arith.constant 0 : i32
    %c0_i32_1 = arith.constant 0 : i32
    return %c0_i32_0, %2 : i32, i32
  }
  func.func @transform_1(%arg0: i32, %arg1: i32) -> (i32, i32) {
    %c1_i32 = arith.constant 1 : i32
    %0 = arith.muli %arg0, %c1_i32 : i32
    %1 = arith.addi %0, %arg1 : i32
    %c0_i32 = arith.constant 0 : i32
    %2 = arith.minsi %1, %c0_i32 : i32
    %c0_i32_0 = arith.constant 0 : i32
    %c0_i32_1 = arith.constant 0 : i32
    return %c0_i32_0, %2 : i32, i32
  }
  func.func @transform_2(%arg0: i32, %arg1: i32) -> (i32, i32) {
    %c0_i32 = arith.constant 0 : i32
    %c0_i32_0 = arith.constant 0 : i32
    return %arg0, %c0_i32 : i32, i32
  }
  func.func @transform_3(%arg0: i32, %arg1: i32) -> (i32, i32) {
    %c0_i32 = arith.constant 0 : i32
    %c0_i32_0 = arith.constant 0 : i32
    return %arg0, %c0_i32 : i32, i32
  }
}

</mosaic_0001>

<llo_original>
// kernel: tpu_custom_call.1
$region0: #{tpu_custom_call.1}
  #allocation0 [shape = 'u32[]', space=smem, size = 0x4, offset = 0x4, fixed_abs, tag = 'smem constant byte address 0x4 - core index']
  #allocation1 [shape = 'u32[144,128]{1,0:T(1,128)}', space=vmem, size = 0x12000, scoped, tag = 'internal scratch']
  #allocation2 [shape = 'f32[5,200]{1,0:T(8,128)}', space=vmem, size = 0x2000, scoped, tag = 'scratch operand']
  #allocation3 [shape = 'f32[1,200]{1,0:T(1,128)}', space=vmem, size = 0x400, scoped, tag = 'scratch operand']
  %s0 = inlined_call_operand.hbm [shape: f32[5,200], index: 0, kind: input, shape index: {}]
  %s1 = inlined_call_operand.vmem [shape: s32[1,200], index: 1, kind: input, shape index: {}]
  %s2 = inlined_call_operand.hbm [shape: f32[8,128], index: 2, kind: output, shape index: {0}]
  %s3 = inlined_call_operand.hbm [shape: f32[8,128], index: 3, kind: output, shape index: {1}]
  %4 = xla_tuple %s2, %s3
  %s5 = sld [smem:[#allocation0]]
  $region38: #{tpu_custom_call.1} parent=0
    _
  %s7 = ssub.s32 1, %s5
  %s8 = scalar_select 0, %s7, %s5
  $region1: #{tpu_custom_call.1} parent=0
    #allocation4 [shape = 'u8[8192]{0}', space=vmem, size = 0x2000, scoped, tag = 'input window, operand 0, single buffered']
    #allocation5 [shape = 's32[1]{0}', space=sflag, size = 0x4, scoped, tag = 'scoped memory for tpu_custom_call.1']
    #allocation6 [shape = 's32[1]{0}', space=sflag, size = 0x4, scoped, tag = 'scoped memory for tpu_custom_call.1']
    #allocation7 [shape = 'u8[4096]{0}', space=vmem, size = 0x1000, scoped, tag = 'output window, operand 0, single buffered']
    #allocation8 [shape = 'u8[4096]{0}', space=vmem, size = 0x1000, scoped, tag = 'output window, operand 1, single buffered']
    #allocation9 [shape = 's32[1]{0}', space=sflag, size = 0x4, scoped, tag = 'scoped memory for tpu_custom_call.1']
    %9 = vsyncpa [#allocation5], 0
    %10 = vsyncpa [#allocation6], 0
    %11 = vsyncpa [#allocation9], 0
    // Predicated region
    $region2: #{tpu_custom_call.1} parent=1 // pred_check
      _
    $region3: #{tpu_custom_call.1} parent=1 // pred_check_branch
      %13 = sbr.rel (0) target = $region5
    $region4: #{tpu_custom_call.1} parent=1 // pred_region
      %s14 = sadd.s32 0, 0
      %p15 = scmp.lt.s32.totalorder %s14, 0
      %s16 = scalar_select %p15, %s14, 0
      %s17 = smul.u32 2, %s16
      %s19 = ssub.s32 256, 256
      %20 = vsyncadd [#allocation5], %s19
      %s21 = smul.addr %s17, 128
      %s22 = scalar_lea.hbm %s0, %s21
      %s24 = sshll.u32 [#allocation4], 4
      %s25 = int_to_ptr.vmem [resolvable:$true] %s24
      %27 = dma.hbm_to_vmem [thread:$0]  %s22, 256, %s25, [#allocation5]
    $region5: #{tpu_custom_call.1} parent=1 // pred_fallthru
      _
    // Predicated region
    $region6: #{tpu_custom_call.1} parent=1 // pred_check
      _
    $region7: #{tpu_custom_call.1} parent=1 // pred_check_branch
      %29 = sbr.rel (0) target = $region9
    $region8: #{tpu_custom_call.1} parent=1 // pred_region
      %s30 = sadd.s32 0, 0
      %p31 = scmp.lt.s32.totalorder %s30, 0
      %s32 = scalar_select %p31, %s30, 0
      %s33 = smul.u32 2, %s32
      %p34 = scmp.lt.s32.totalorder %s33, 1
      %s35 = scalar_select %p34, %s33, 1
      %s36 = scalar_lea.vmem %s1, %s35
      %s37 = sadd.s32 0, 0
      %p38 = scmp.lt.s32.totalorder %s37, 0
      %s39 = scalar_select %p38, %s37, 0
      %s40 = smul.u32 2, %s39
    $region9: #{tpu_custom_call.1} parent=1 // pred_fallthru
      _
    // Predicated region
    $region10: #{tpu_custom_call.1} parent=1 // pred_check
      _
    $region11: #{tpu_custom_call.1} parent=1 // pred_check_branch
      %42 = sbr.rel (0) target = $region13
    $region12: #{tpu_custom_call.1} parent=1 // pred_region
      %43 = dma.done [#allocation5], 256
    $region13: #{tpu_custom_call.1} parent=1 // pred_fallthru
      _
    %s44 = sadd.s32 0, 0
    %p45 = scmp.lt.s32.totalorder %s44, 0
    %s46 = scalar_select %p45, %s44, 0
    %s47 = smul.u32 2, %s46
    %p48 = scmp.lt.s32.totalorder %s47, 1
    %s49 = scalar_select %p48, %s47, 1
    %s50 = scalar_lea.vmem %s1, %s49
    %s51 = sadd.s32 0, 0
    %p52 = scmp.lt.s32.totalorder %s51, 0
    %s53 = scalar_select %p52, %s51, 0
    %s54 = smul.u32 2, %s53
    %s55 = sadd.s32 0, 0
    %p56 = scmp.lt.s32.totalorder %s55, 0
    %s57 = scalar_select %p56, %s55, 0
    %s58 = smul.u32 2, %s57
    %p59 = scmp.lt.s32.totalorder %s58, 1
    %s60 = scalar_select %p59, %s58, 1
    %s61 = scalar_lea.vmem %s1, %s60
    %s62 = sadd.s32 0, 0
    %p63 = scmp.lt.s32.totalorder %s62, 0
    %s64 = scalar_select %p63, %s62, 0
    %s65 = smul.u32 2, %s64
    %p66 = scmp.eq.s32.totalorder 0, 0
    // Predicated region
    $region14: #{tpu_custom_call.1} parent=1 // pred_check
      %p67 = pneg %p66
    $region15: #{tpu_custom_call.1} parent=1 // pred_check_branch
      %69 = sbr.rel (%p67) target = $region17
    $region16: #{tpu_custom_call.1} parent=1 // pred_region
      %70 = vst [vmem:[#allocation2] sm:$0x1f] 0.0
      %vm71 = vcmask 585728
      %72 = vst.msk [vmem:[#allocation2 + $0x8] sm:$0x1f] %vm71, 0.0
      %v73 = vlaneseq
      %vm74 = vcmp.ge.s32.totalorder %v73, 0
      %vm75 = vcmp.lt.s32.totalorder %v73, 200
      %vm76 = vmand %vm74, %vm75
      %77 = vst.msk [vmem:[#allocation3] sm:$0x3] %vm76, 0.0
    $region17: #{tpu_custom_call.1} parent=1 // pred_fallthru
      _
    %v78 = vld [vmem:[#allocation4] sm:$0x1f]
    %v79 = vld [vmem:[#allocation4 + $0x8] sm:$0x1f]
    %v80 = vld [vmem:[%s61] sm:$0x3]
    %s81 = sadd.s32 0, 0
    %v82 = vlaneseq
    %v83 = vand.u32 %v82, 127
    %v84 = vadd.s32 %v83, 128
    %s85 = smul.u32 %s81, 200
    %v86 = vstv %s85
    %v87 = vadd.s32 %v83, %v86
    %v88 = vadd.s32 %v84, %v86
    %vm89 = vcmp.lt.s32.totalorder %v87, 200
    %vm90 = vcmp.lt.s32.totalorder %v88, 200
    %v91 = vlaneseq
    %v92 = vshrl.u32 %v91, 7
    %v93 = vsub.s32 0, %v92
    %v94 = vrot.slane %v80, %v93
    %v95 = vlaneseq
    %v96 = vshrl.u32 %v95, 7
    %v97 = vsub.s32 1, %v96
    %v98 = vrot.slane %v80, %v97
    %v99 = vsel %vm89, %v94, 4294967295
    %v100 = vsel %vm90, %v98, 4294967295
    %v101 = vlaneseq
    %v102 = vshrl.u32 %v101, 7
    %v103 = vsub.s32 %v102, 1
    %v104 = vlaneseq
    %v105 = vshrl.u32 %v104, 7
    %v106 = vsub.s32 0, %v105
    %v107 = vrot.slane %v99, %v106
    %v108 = vlaneseq
    %v109 = vshrl.u32 %v108, 7
    %v110 = vsub.s32 0, %v109
    %v111 = vrot.slane %v100, %v110
    %vm112 = vcmp.gt.s32.totalorder %v107, %v103
    %vm113 = vcmp.gt.s32.totalorder %v111, %v103
    %vm114 = vcmp.lt.s32.totalorder %v102, 4
    %vm115 = vmand %vm112, %vm114
    %vm116 = vmand %vm113, %vm114
    %vm117 = vcmp.gt.s32.totalorder %v107, %v102
    %vm118 = vcmp.gt.s32.totalorder %v111, %v102
    %v119 = vsel %vm117, 1, 0
    %v120 = vsel %vm118, 1, 0
    %v121 = vcvt.s32.f32 %v119
    %v122 = vcvt.s32.f32 %v120
    %v123 = vmax.f32 %v78, 0.0
    %v124 = vmax.f32 %v79, 0.0
    %v125 = vand.u32 2147483647, %v78
    %v126 = vand.u32 2147483647, %v79
    %v127 = vsub.f32 0.0, %v125
    %v128 = vsub.f32 0.0, %v126
    %v129 = vmul.f32 %v127, 1.442695
    %v130 = vpow.pop %v129
    %v131 = vmul.f32 %v128, 1.442695
    %v132 = vpow.pop %v131
    %v133 = vadd.f32 %v130, 1.0
    %v134 = vadd.f32 %v132, 1.0
    %v135 = vlog2.pop %v133
    %v136 = vmul.f32 %v135, 0.6931472
    %v137 = vlog2.pop %v134
    %v138 = vmul.f32 %v137, 0.6931472
    %v139 = vadd.f32 %v123, %v136
    %v140 = vadd.f32 %v124, %v138
    %v141 = vmul.f32 %v121, %v78
    %v142 = vmul.f32 %v122, %v79
    %v143 = vsub.f32 %v139, %v141
    %v144 = vsub.f32 %v140, %v142
    %v145 = vld [vmem:[#allocation2] sm:$0x1f]
    %v146 = vld [vmem:[#allocation2 + $0x8] sm:$0x1f]
    %v147 = vsel %vm115, %v143, 0.0
    %v148 = vsel %vm116, %v144, 0.0
    %v149 = vadd.f32 %v145, %v147
    %v150 = vadd.f32 %v146, %v148
    %151 = vst [vmem:[#allocation2] sm:$0x1f] %v149
    %vm152 = vcmask 585728
    %153 = vst.msk [vmem:[#allocation2 + $0x8] sm:$0x1f] %vm152, %v150
    %v154 = vld [vmem:[#allocation3] sm:$0x3]
    %v155 = vadd.s32 %v99, 1
    %v156 = vadd.s32 %v100, 1
    %vm157 = vcmp.gt.s32.totalorder %v155, 0
    %v158 = vsel %vm157, %v155, 0
    %vm159 = vcmp.gt.s32.totalorder %v156, 0
    %v160 = vsel %vm159, %v156, 0
    %vm161 = vcmp.lt.s32.totalorder %v158, 4
    %v162 = vsel %vm161, %v158, 4
    %vm163 = vcmp.lt.s32.totalorder %v160, 4
    %v164 = vsel %vm163, %v160, 4
    %v165 = vcvt.s32.f32 %v162
    %v166 = vcvt.s32.f32 %v164
    %v169 = vcombine.low %v165, %v166
    %v171 = vunpack.c.l.s4 1966171168
    %v172 = vunpack.c.0.s8 %v171
    %v173 = vlaneseq
    %v174 = vshrl.u32 %v173, 7
    %v175 = vsub.s32 %v172, %v174
    %v176 = vrot.slane %v169, %v175
    %v178 = vunpack.c.l.s4 1966171168
    %v179 = vunpack.c.0.s8 %v178
    %v180 = vlaneseq
    %v181 = vshrl.u32 %v180, 7
    %v182 = vsub.s32 %v179, %v181
    %v183 = vrot.slane %v176, %v182
    %v185 = vadd.f32 %v154, %v183
    %v186 = vlaneseq
    %vm187 = vcmp.ge.s32.totalorder %v186, 0
    %vm188 = vcmp.lt.s32.totalorder %v186, 200
    %vm189 = vmand %vm187, %vm188
    %190 = vst.msk [vmem:[#allocation3] sm:$0x3] %vm189, %v185
    // Predicated region
    $region18: #{tpu_custom_call.1} parent=1 // pred_check
      %p191 = pneg %p66
    $region19: #{tpu_custom_call.1} parent=1 // pred_check_branch
      %193 = sbr.rel (%p191) target = $region21
    $region20: #{tpu_custom_call.1} parent=1 // pred_region
      %v194 = vld [vmem:[#allocation2] sm:$0x1f]
      %v195 = vld [vmem:[#allocation2 + $0x8] sm:$0x1f]
      %vm196 = vcmask 1044480
      %v197 = vsel %vm196, %v194, 0.0
      %v198 = vsel %vm152, %v195, 0.0
      %v199 = vadd.f32 %v197, %v198
      %200 = vadd.xlane.f32.xlu0 %v199
      %v201 = vpop.xlane.xlu0 %200
      %v202 = vrot.slane %v201, 4
      %v203 = vadd.f32 %v201, %v202
      %v204 = vrot.slane %v203, 2
      %v205 = vadd.f32 %v203, %v204
      %v206 = vrot.slane %v205, 1
      %v207 = vadd.f32 %v205, %v206
      %s208 = vtos %v207
      %v209 = vstv %s208
      %210 = vst [vmem:[#allocation7] sm:$0xff] %v209
      %v211 = vld [vmem:[#allocation3] sm:$0x3]
      %v213 = vlaneseq
      %v214 = vshrl.u32 %v213, 7
      %v215 = vsub.s32 0, %v214
      %v216 = vrot.slane %v211, %v215
      %v217 = vlaneseq
      %v218 = vshrl.u32 %v217, 7
      %v219 = vsub.s32 1, %v218
      %v220 = vrot.slane %v211, %v219
      %vm223 = vcmask 1040384
      %v224 = vsel %vm223, %v216, 0.0
      %vm225 = vcmask 581632
      %v226 = vsel %vm225, %v220, 0.0
      %v227 = vadd.f32 %v224, %v226
      %228 = vadd.xlane.f32.xlu0 %v227
      %v229 = vpop.xlane.xlu0 %228
      %v230 = vrot.slane %v229, 4
      %v231 = vadd.f32 %v229, %v230
      %v232 = vrot.slane %v231, 2
      %v233 = vadd.f32 %v231, %v232
      %v234 = vrot.slane %v233, 1
      %v235 = vadd.f32 %v233, %v234
      %s236 = vtos %v235
      %v237 = vstv %s236
      %238 = vst [vmem:[#allocation8] sm:$0xff] %v237
    $region21: #{tpu_custom_call.1} parent=1 // pred_fallthru
      _
    // Predicated region
    $region22: #{tpu_custom_call.1} parent=1 // pred_check
      _
    $region23: #{tpu_custom_call.1} parent=1 // pred_check_branch
      %240 = sbr.rel (0) target = $region25
    $region24: #{tpu_custom_call.1} parent=1 // pred_region
      %s242 = ssub.s32 128, 128
      %243 = vsyncadd [#allocation6], %s242
      %s245 = sshll.u32 [#allocation7], 4
      %s246 = int_to_ptr.vmem [resolvable:$true] %s245
      %248 = dma.vmem_to_hbm [thread:$0]  %s246, 128, %s2, [#allocation6]
    $region25: #{tpu_custom_call.1} parent=1 // pred_fallthru
      _
    // Predicated region
    $region26: #{tpu_custom_call.1} parent=1 // pred_check
      _
    $region27: #{tpu_custom_call.1} parent=1 // pred_check_branch
      %250 = sbr.rel (0) target = $region29
    $region28: #{tpu_custom_call.1} parent=1 // pred_region
      %s252 = ssub.s32 128, 128
      %253 = vsyncadd [#allocation9], %s252
      %s255 = sshll.u32 [#allocation8], 4
      %s256 = int_to_ptr.vmem [resolvable:$true] %s255
      %258 = dma.vmem_to_hbm [thread:$0]  %s256, 128, %s3, [#allocation9]
    $region29: #{tpu_custom_call.1} parent=1 // pred_fallthru
      _
    // Predicated region
    $region30: #{tpu_custom_call.1} parent=1 // pred_check
      _
    $region31: #{tpu_custom_call.1} parent=1 // pred_check_branch
      %260 = sbr.rel (0) target = $region33
    $region32: #{tpu_custom_call.1} parent=1 // pred_region
      %261 = dma.done [#allocation6], 128
    $region33: #{tpu_custom_call.1} parent=1 // pred_fallthru
      _
    // Predicated region
    $region34: #{tpu_custom_call.1} parent=1 // pred_check
      _
    $region35: #{tpu_custom_call.1} parent=1 // pred_check_branch
      %263 = sbr.rel (0) target = $region37
    $region36: #{tpu_custom_call.1} parent=1 // pred_region
      %264 = dma.done [#allocation9], 128
    $region37: #{tpu_custom_call.1} parent=1 // pred_fallthru
      _
    %265 = vsyncpa [#allocation5], 1
    %266 = vsyncpa [#allocation6], 1
    %267 = vsyncpa [#allocation9], 1

</llo_original>
